<compile_context>
chip_gen: v6e
topology: v6e:2x2x1
jax: 0.10.0
libtpu: 0.0.40
codegen_flags: <defaults>
</compile_context>

<pallas_src>
import jax
import jax.numpy as jnp
from jax.experimental import pallas as pl

# ---------------- configuration ----------------------------------------------
IN_CHANNELS = 4
CENTER_CH = 1
OFFSET_CH = 2
EMBED_CH = 8
TOTAL_ROWS = 16          # emb(0:8) + center(8) + offset(9:11) + pad(11:16)
NORM_EPS = 1e-12         # F.normalize default eps

B, H, W = 2, 16, 16
S = H * W                # 256 -> lane-dense (multiple of 128)


# ---------------- Pallas kernel ----------------------------------------------
def instance_head_kernel(x_ref, w_ref, b_ref, y_ref):
    # x_ref: (B, C, S) f32, w_ref: (16, C) f32, b_ref: (16, 1) f32
    # y_ref: (B, 16, S) f32  -- fused output slab.
    bsz, n_in, s = x_ref.shape
    n_rows = w_ref.shape[0]

    x = x_ref[...]                                    # (B, C, S)
    w = w_ref[...]                                    # (16, C)
    bias = b_ref[...]                                 # (16, 1)

    # Fused 1x1 convs on the VPU: statically unrolled K=4 broadcast FMAs,
    # bias folded in as the accumulator init.
    y = bias[None, :, :]                              # (1, 16, 1)
    for c in range(n_in):                             # static unroll, K = 4
        y = y + w[:, c:c + 1][None, :, :] * x[:, c:c + 1, :]
    # y: (B, 16, S) f32

    # Embedding rows 0:8 -> channel-wise L2 normalize (F.normalize semantics:
    # x / max(||x||, eps)  ==  x * min(rsqrt(sum x^2), 1/eps)).
    emb = y[:, :EMBED_CH, :]                          # (B, 8, S)
    ss = jnp.sum(emb * emb, axis=1, keepdims=True)    # (B, 1, S)
    inv_norm = jnp.minimum(jax.lax.rsqrt(ss), 1.0 / NORM_EPS)

    # Center row 8 -> sigmoid (computed on the single row only).
    sig = jax.nn.sigmoid(y[:, EMBED_CH:EMBED_CH + 1, :])   # (B, 1, S)

    # Offset rows 9:11 (and zero pad rows 11:16) -> identity.
    row = jax.lax.broadcasted_iota(jnp.int32, (bsz, n_rows, s), 1)
    out = jnp.where(row < EMBED_CH, y * inv_norm,
                    jnp.where(row == EMBED_CH, sig, y))
    y_ref[...] = out.astype(y_ref.dtype)              # one dense (B,16,S) store


# ---------------- wrapper -----------------------------------------------------
def _pack_params(params):
    c_in = params["w_emb"].shape[1]
    pad = TOTAL_ROWS - (EMBED_CH + CENTER_CH + OFFSET_CH)
    w_all = jnp.concatenate(
        [params["w_emb"].astype(jnp.float32),
         params["w_center"].astype(jnp.float32),
         params["w_offset"].astype(jnp.float32),
         jnp.zeros((pad, c_in), jnp.float32)], axis=0)            # (16, C)
    b_all = jnp.concatenate(
        [params["b_emb"].astype(jnp.float32),
         params["b_center"].astype(jnp.float32),
         params["b_offset"].astype(jnp.float32),
         jnp.zeros((pad,), jnp.float32)])[:, None]                # (16, 1)
    return w_all, b_all


@jax.jit
def _instance_head_fused(x_nchw, params):
    b, c, h, w = x_nchw.shape
    s = h * w
    x_cs = x_nchw.reshape(b, c, s)            # free reshape, channel-major kept
    w_all, b_all = _pack_params(params)

    y = pl.pallas_call(
        instance_head_kernel,
        out_shape=jax.ShapeDtypeStruct((b, TOTAL_ROWS, s), jnp.float32),
    )(x_cs, w_all, b_all)

    emb = y[:, :EMBED_CH, :].reshape(b, EMBED_CH, h, w)
    center = y[:, EMBED_CH:EMBED_CH + CENTER_CH, :].reshape(b, CENTER_CH, h, w)
    off_lo = EMBED_CH + CENTER_CH
    offset = y[:, off_lo:off_lo + OFFSET_CH, :].reshape(b, OFFSET_CH, h, w)
    return center, offset, emb


def instance_head(x_nchw, params):
    """x_nchw: (B, C, H, W) f32 -> (center (B,1,H,W), offset (B,2,H,W),
    embedding (B,8,H,W))."""
    if x_nchw.ndim != 4:
        raise ValueError(f"Expected 4D input tensor, got {x_nchw.ndim}D")
    c_in = params["w_center"].shape[1]
    if x_nchw.shape[1] != c_in:
        raise ValueError(
            f"Expected {c_in} input channels, got {x_nchw.shape[1]}")
    return _instance_head_fused(x_nchw, params)


# ---------------- pure-JAX reference (sanity check) ---------------------------
def reference_forward(x_nchw, params):
    def conv1x1(x, w, bias):  # w: (out, in), bias: (out,)
        return (jnp.einsum("oc,bchw->bohw", w, x)
                + bias[None, :, None, None])

    center = jax.nn.sigmoid(conv1x1(x_nchw, params["w_center"], params["b_center"]))
    offset = conv1x1(x_nchw, params["w_offset"], params["b_offset"])
    emb = conv1x1(x_nchw, params["w_emb"], params["b_emb"])
    norm = jnp.sqrt(jnp.sum(emb * emb, axis=1, keepdims=True))
    emb = emb / jnp.maximum(norm, NORM_EPS)
    return center, offset, emb


# ---------------- deterministic parameter init --------------------------------
def init_params(key):
    ks = jax.random.split(key, 6)
    std = 0.1
    return {
        "w_center": jax.random.normal(ks[0], (CENTER_CH, IN_CHANNELS), jnp.float32) * std,
        "b_center": jax.random.normal(ks[1], (CENTER_CH,), jnp.float32) * std,
        "w_offset": jax.random.normal(ks[2], (OFFSET_CH, IN_CHANNELS), jnp.float32) * std,
        "b_offset": jax.random.normal(ks[3], (OFFSET_CH,), jnp.float32) * std,
        "w_emb":    jax.random.normal(ks[4], (EMBED_CH, IN_CHANNELS), jnp.float32) * std,
        "b_emb":    jax.random.normal(ks[5], (EMBED_CH,), jnp.float32) * std,
    }


if __name__ == "__main__":
    key = jax.random.PRNGKey(0)
    pkey, xkey = jax.random.split(key)
    params = init_params(pkey)
    x = jax.random.normal(xkey, (B, IN_CHANNELS, H, W), jnp.float32)

    center, offset, emb = instance_head(x, params)
    center = jax.block_until_ready(center)
    offset = jax.block_until_ready(offset)
    emb = jax.block_until_ready(emb)

    assert center.shape == (B, CENTER_CH, H, W), center.shape
    assert offset.shape == (B, OFFSET_CH, H, W), offset.shape
    assert emb.shape == (B, EMBED_CH, H, W), emb.shape

    rc, ro, re = jax.block_until_ready(reference_forward(x, params))
    for got, ref in ((center, rc), (offset, ro), (emb, re)):
        err = float(jnp.max(jnp.abs(got - ref)))
        assert jnp.allclose(got, ref, atol=1e-4, rtol=1e-4), err

    print("KERNEL_OK")
</pallas_src>

<mosaic_0001>
module attributes {stable_mosaic.version = 11 : i64} {
  func.func @instance_head_kernel(%arg0: memref<2x4x256xf32, #tpu.memory_space<vmem>>, %arg1: memref<16x4xf32, #tpu.memory_space<vmem>>, %arg2: memref<16x1xf32, #tpu.memory_space<vmem>>, %arg3: memref<2x16x256xf32, #tpu.memory_space<vmem>>) attributes {dimension_semantics = [], scalar_prefetch = 0 : i64, scratch_operands = 0 : i64, tpu.core_type = #tpu.core_type<tc>} {
    %c0 = arith.constant 0 : index
    %c0_0 = arith.constant 0 : index
    %c0_1 = arith.constant 0 : index
    %0 = vector.load %arg0[%c0, %c0_0, %c0_1] : memref<2x4x256xf32, #tpu.memory_space<vmem>>, vector<2x4x256xf32>
    %c0_2 = arith.constant 0 : index
    %c0_3 = arith.constant 0 : index
    %1 = vector.load %arg1[%c0_2, %c0_3] : memref<16x4xf32, #tpu.memory_space<vmem>>, vector<16x4xf32>
    %c0_4 = arith.constant 0 : index
    %c0_5 = arith.constant 0 : index
    %2 = vector.load %arg2[%c0_4, %c0_5] : memref<16x1xf32, #tpu.memory_space<vmem>>, vector<16x1xf32>
    %3 = vector.shape_cast %2 : vector<16x1xf32> to vector<1x16x1xf32>
    %4 = vector.extract_strided_slice %1 {offsets = [0, 0], sizes = [16, 1], strides = [1, 1]} : vector<16x4xf32> to vector<16x1xf32>
    %5 = vector.shape_cast %4 : vector<16x1xf32> to vector<1x16x1xf32>
    %6 = vector.extract_strided_slice %0 {offsets = [0, 0, 0], sizes = [2, 1, 256], strides = [1, 1, 1]} : vector<2x4x256xf32> to vector<2x1x256xf32>
    %7 = vector.broadcast %5 : vector<1x16x1xf32> to vector<2x16x256xf32>
    %8 = vector.broadcast %6 : vector<2x1x256xf32> to vector<2x16x256xf32>
    %9 = arith.mulf %7, %8 : vector<2x16x256xf32>
    %10 = vector.broadcast %3 : vector<1x16x1xf32> to vector<2x16x256xf32>
    %11 = arith.addf %10, %9 : vector<2x16x256xf32>
    %12 = vector.extract_strided_slice %1 {offsets = [0, 1], sizes = [16, 1], strides = [1, 1]} : vector<16x4xf32> to vector<16x1xf32>
    %13 = vector.shape_cast %12 : vector<16x1xf32> to vector<1x16x1xf32>
    %14 = vector.extract_strided_slice %0 {offsets = [0, 1, 0], sizes = [2, 1, 256], strides = [1, 1, 1]} : vector<2x4x256xf32> to vector<2x1x256xf32>
    %15 = vector.broadcast %13 : vector<1x16x1xf32> to vector<2x16x256xf32>
    %16 = vector.broadcast %14 : vector<2x1x256xf32> to vector<2x16x256xf32>
    %17 = arith.mulf %15, %16 : vector<2x16x256xf32>
    %18 = arith.addf %11, %17 : vector<2x16x256xf32>
    %19 = vector.extract_strided_slice %1 {offsets = [0, 2], sizes = [16, 1], strides = [1, 1]} : vector<16x4xf32> to vector<16x1xf32>
    %20 = vector.shape_cast %19 : vector<16x1xf32> to vector<1x16x1xf32>
    %21 = vector.extract_strided_slice %0 {offsets = [0, 2, 0], sizes = [2, 1, 256], strides = [1, 1, 1]} : vector<2x4x256xf32> to vector<2x1x256xf32>
    %22 = vector.broadcast %20 : vector<1x16x1xf32> to vector<2x16x256xf32>
    %23 = vector.broadcast %21 : vector<2x1x256xf32> to vector<2x16x256xf32>
    %24 = arith.mulf %22, %23 : vector<2x16x256xf32>
    %25 = arith.addf %18, %24 : vector<2x16x256xf32>
    %26 = vector.extract_strided_slice %1 {offsets = [0, 3], sizes = [16, 1], strides = [1, 1]} : vector<16x4xf32> to vector<16x1xf32>
    %27 = vector.shape_cast %26 : vector<16x1xf32> to vector<1x16x1xf32>
    %28 = vector.extract_strided_slice %0 {offsets = [0, 3, 0], sizes = [2, 1, 256], strides = [1, 1, 1]} : vector<2x4x256xf32> to vector<2x1x256xf32>
    %29 = vector.broadcast %27 : vector<1x16x1xf32> to vector<2x16x256xf32>
    %30 = vector.broadcast %28 : vector<2x1x256xf32> to vector<2x16x256xf32>
    %31 = arith.mulf %29, %30 : vector<2x16x256xf32>
    %32 = arith.addf %25, %31 : vector<2x16x256xf32>
    %33 = vector.extract_strided_slice %32 {offsets = [0, 0, 0], sizes = [2, 8, 256], strides = [1, 1, 1]} : vector<2x16x256xf32> to vector<2x8x256xf32>
    %34 = arith.mulf %33, %33 : vector<2x8x256xf32>
    %cst = arith.constant dense<0.000000e+00> : vector<2x256xf32>
    %35 = vector.multi_reduction <add>, %34, %cst [1] : vector<2x8x256xf32> to vector<2x256xf32>
    %36 = vector.shape_cast %35 : vector<2x256xf32> to vector<2x1x256xf32>
    %37 = math.rsqrt %36 : vector<2x1x256xf32>
    %cst_6 = arith.constant 9.99999995E+11 : f32
    %38 = vector.broadcast %cst_6 : f32 to vector<2x1x256xf32>
    %39 = arith.minimumf %37, %38 : vector<2x1x256xf32>
    %40 = vector.extract_strided_slice %32 {offsets = [0, 8, 0], sizes = [2, 1, 256], strides = [1, 1, 1]} : vector<2x16x256xf32> to vector<2x1x256xf32>
    %41 = arith.negf %40 : vector<2x1x256xf32>
    %42 = math.exp %41 : vector<2x1x256xf32>
    %cst_7 = arith.constant 1.000000e+00 : f32
    %43 = vector.broadcast %cst_7 : f32 to vector<2x1x256xf32>
    %44 = arith.addf %43, %42 : vector<2x1x256xf32>
    %45 = arith.divf %43, %44 : vector<2x1x256xf32>
    %46 = tpu.iota {dimensions = array<i32: 1>} : vector<2x16x256xi32>
    %c8_i32 = arith.constant 8 : i32
    %47 = vector.broadcast %c8_i32 : i32 to vector<2x16x256xi32>
    %48 = arith.cmpi slt, %46, %47 : vector<2x16x256xi32>
    %49 = vector.broadcast %39 : vector<2x1x256xf32> to vector<2x16x256xf32>
    %50 = arith.mulf %32, %49 : vector<2x16x256xf32>
    %c8_i32_8 = arith.constant 8 : i32
    %51 = vector.broadcast %c8_i32_8 : i32 to vector<2x16x256xi32>
    %52 = arith.cmpi eq, %46, %51 : vector<2x16x256xi32>
    %53 = vector.shape_cast %45 : vector<2x1x256xf32> to vector<2x1x256xf32>
    %54 = vector.broadcast %53 : vector<2x1x256xf32> to vector<2x16x256xf32>
    %55 = arith.select %52, %54, %32 : vector<2x16x256xi1>, vector<2x16x256xf32>
    %56 = arith.select %48, %50, %55 : vector<2x16x256xi1>, vector<2x16x256xf32>
    %c0_9 = arith.constant 0 : index
    %c0_10 = arith.constant 0 : index
    %c0_11 = arith.constant 0 : index
    %57 = vector.load %arg3[%c0_9, %c0_10, %c0_11] : memref<2x16x256xf32, #tpu.memory_space<vmem>>, vector<2x16x256xf32>
    tpu.vector_store %arg3[%c0_9, %c0_10, %c0_11], %56 {strides = array<i32>} : memref<2x16x256xf32, #tpu.memory_space<vmem>>, vector<2x16x256xf32>,
    return
  }
}

</mosaic_0001>

<llo_original>
// kernel: _instance_head_fused.1
$region0: #{_instance_head_fused.1}
  #allocation0 [shape = 'u32[]', space=smem, size = 0x4, offset = 0x4, fixed_abs, tag = 'smem constant byte address 0x4 - core index']
  #allocation1 [shape = 'u32[144,128]{1,0:T(1,128)}', space=vmem, size = 0x12000, scoped, tag = 'internal scratch']
  %s0 = inlined_call_operand.vmem [shape: f32[2,4,256], index: 0, kind: input, shape index: {}]
  %s1 = inlined_call_operand.vmem [shape: f32[16,4], index: 1, kind: input, shape index: {}]
  %s2 = inlined_call_operand.vmem [shape: f32[16,1], index: 2, kind: input, shape index: {}]
  %s3 = inlined_call_operand.vmem [shape: f32[2,16,256], index: 3, kind: output, shape index: {}]
  %s4 = sld [smem:[#allocation0]]
  $region22: #{_instance_head_fused.1} parent=0
    _
  %s6 = ssub.s32 1, %s4
  %s7 = scalar_select 0, %s6, %s4
  // Predicated region
  $region2: #{_instance_head_fused.1} parent=0 // pred_check
    _
  $region3: #{_instance_head_fused.1} parent=0 // pred_check_branch
    %9 = sbr.rel (0) target = $region5
  $region4: #{_instance_head_fused.1} parent=0 // pred_region
    _
  $region5: #{_instance_head_fused.1} parent=0 // pred_fallthru
    _
  // Predicated region
  $region6: #{_instance_head_fused.1} parent=0 // pred_check
    _
  $region7: #{_instance_head_fused.1} parent=0 // pred_check_branch
    %11 = sbr.rel (0) target = $region9
  $region8: #{_instance_head_fused.1} parent=0 // pred_region
    _
  $region9: #{_instance_head_fused.1} parent=0 // pred_fallthru
    _
  // Predicated region
  $region10: #{_instance_head_fused.1} parent=0 // pred_check
    _
  $region11: #{_instance_head_fused.1} parent=0 // pred_check_branch
    %13 = sbr.rel (0) target = $region13
  $region12: #{_instance_head_fused.1} parent=0 // pred_region
    _
  $region13: #{_instance_head_fused.1} parent=0 // pred_fallthru
    _
  %v14 = vld [vmem:[%s0] sm:$0xff]
  %v15 = vld [vmem:[%s0 + $0x8] sm:$0xff]
  %v16 = vld [vmem:[%s1] sm:$0xff]
  %v17 = vld [vmem:[%s1 + $0x8] sm:$0xff]
  %v18 = vld [vmem:[%s2] sm:$0xff]
  %v19 = vld [vmem:[%s2 + $0x8] sm:$0xff]
  %21 = vset.pattern.permute.xlu0 0
  %22 = vperm.xlu0 %21, %v16
  %v23 = vpop.permute.xlu0 %22
  %26 = vset.pattern.permute.xlu0 0
  %27 = vperm.xlu0 %26, %v17
  %v28 = vpop.permute.xlu0 %27
  %v32 = vlaneseq
  %v33 = vshrl.u32 %v32, 7
  %v34 = vsub.s32 0, %v33
  %v35 = vrot.slane %v14, %v34
  %v36 = vlaneseq
  %v37 = vshrl.u32 %v36, 7
  %v38 = vsub.s32 4, %v37
  %v39 = vrot.slane %v14, %v38
  %v40 = vlaneseq
  %v41 = vshrl.u32 %v40, 7
  %v42 = vsub.s32 0, %v41
  %v43 = vrot.slane %v15, %v42
  %v44 = vlaneseq
  %v45 = vshrl.u32 %v44, 7
  %v46 = vsub.s32 4, %v45
  %v47 = vrot.slane %v15, %v46
  %v52 = vlaneseq
  %v53 = vshrl.u32 %v52, 7
  %v54 = vsub.s32 0, %v53
  %v55 = vrot.slane %v35, %v54
  %v56 = vlaneseq
  %v57 = vshrl.u32 %v56, 7
  %v58 = vsub.s32 0, %v57
  %v59 = vrot.slane %v39, %v58
  %v60 = vlaneseq
  %v61 = vshrl.u32 %v60, 7
  %v62 = vsub.s32 0, %v61
  %v63 = vrot.slane %v43, %v62
  %v64 = vlaneseq
  %v65 = vshrl.u32 %v64, 7
  %v66 = vsub.s32 0, %v65
  %v67 = vrot.slane %v47, %v66
  %v68 = vmul.f32 %v23, %v55
  %v69 = vmul.f32 %v23, %v59
  %v70 = vmul.f32 %v28, %v55
  %v71 = vmul.f32 %v28, %v59
  %v72 = vmul.f32 %v23, %v63
  %v73 = vmul.f32 %v23, %v67
  %v74 = vmul.f32 %v28, %v63
  %v75 = vmul.f32 %v28, %v67
  %77 = vset.pattern.permute.xlu0 0
  %78 = vperm.xlu0 %77, %v18
  %v79 = vpop.permute.xlu0 %78
  %82 = vset.pattern.permute.xlu0 0
  %83 = vperm.xlu0 %82, %v19
  %v84 = vpop.permute.xlu0 %83
  %v86 = vadd.f32 %v79, %v68
  %v87 = vadd.f32 %v79, %v69
  %v88 = vadd.f32 %v84, %v70
  %v89 = vadd.f32 %v84, %v71
  %v90 = vadd.f32 %v79, %v72
  %v91 = vadd.f32 %v79, %v73
  %v92 = vadd.f32 %v84, %v74
  %v93 = vadd.f32 %v84, %v75
  %94 = vset.pattern.permute.xlu0 1
  %95 = vperm.xlu0 %94, %v16
  %v96 = vpop.permute.xlu0 %95
  %98 = vset.pattern.permute.xlu0 1
  %99 = vperm.xlu0 %98, %v17
  %v100 = vpop.permute.xlu0 %99
  %v102 = vlaneseq
  %v103 = vshrl.u32 %v102, 7
  %v104 = vsub.s32 1, %v103
  %v105 = vrot.slane %v14, %v104
  %v106 = vlaneseq
  %v107 = vshrl.u32 %v106, 7
  %v108 = vsub.s32 5, %v107
  %v109 = vrot.slane %v14, %v108
  %v110 = vlaneseq
  %v111 = vshrl.u32 %v110, 7
  %v112 = vsub.s32 1, %v111
  %v113 = vrot.slane %v15, %v112
  %v114 = vlaneseq
  %v115 = vshrl.u32 %v114, 7
  %v116 = vsub.s32 5, %v115
  %v117 = vrot.slane %v15, %v116
  %v122 = vlaneseq
  %v123 = vshrl.u32 %v122, 7
  %v124 = vsub.s32 1, %v123
  %v125 = vrot.slane %v105, %v124
  %v126 = vlaneseq
  %v127 = vshrl.u32 %v126, 7
  %v128 = vsub.s32 1, %v127
  %v129 = vrot.slane %v109, %v128
  %v130 = vlaneseq
  %v131 = vshrl.u32 %v130, 7
  %v132 = vsub.s32 1, %v131
  %v133 = vrot.slane %v113, %v132
  %v134 = vlaneseq
  %v135 = vshrl.u32 %v134, 7
  %v136 = vsub.s32 1, %v135
  %v137 = vrot.slane %v117, %v136
  %v138 = vmul.f32 %v96, %v125
  %v139 = vmul.f32 %v96, %v129
  %v140 = vmul.f32 %v100, %v125
  %v141 = vmul.f32 %v100, %v129
  %v142 = vmul.f32 %v96, %v133
  %v143 = vmul.f32 %v96, %v137
  %v144 = vmul.f32 %v100, %v133
  %v145 = vmul.f32 %v100, %v137
  %v146 = vadd.f32 %v86, %v138
  %v147 = vadd.f32 %v87, %v139
  %v148 = vadd.f32 %v88, %v140
  %v149 = vadd.f32 %v89, %v141
  %v150 = vadd.f32 %v90, %v142
  %v151 = vadd.f32 %v91, %v143
  %v152 = vadd.f32 %v92, %v144
  %v153 = vadd.f32 %v93, %v145
  %154 = vset.pattern.permute.xlu0 2
  %155 = vperm.xlu0 %154, %v16
  %v156 = vpop.permute.xlu0 %155
  %158 = vset.pattern.permute.xlu0 2
  %159 = vperm.xlu0 %158, %v17
  %v160 = vpop.permute.xlu0 %159
  %v162 = vlaneseq
  %v163 = vshrl.u32 %v162, 7
  %v164 = vsub.s32 2, %v163
  %v165 = vrot.slane %v14, %v164
  %v166 = vlaneseq
  %v167 = vshrl.u32 %v166, 7
  %v168 = vsub.s32 6, %v167
  %v169 = vrot.slane %v14, %v168
  %v170 = vlaneseq
  %v171 = vshrl.u32 %v170, 7
  %v172 = vsub.s32 2, %v171
  %v173 = vrot.slane %v15, %v172
  %v174 = vlaneseq
  %v175 = vshrl.u32 %v174, 7
  %v176 = vsub.s32 6, %v175
  %v177 = vrot.slane %v15, %v176
  %v182 = vlaneseq
  %v183 = vshrl.u32 %v182, 7
  %v184 = vsub.s32 2, %v183
  %v185 = vrot.slane %v165, %v184
  %v186 = vlaneseq
  %v187 = vshrl.u32 %v186, 7
  %v188 = vsub.s32 2, %v187
  %v189 = vrot.slane %v169, %v188
  %v190 = vlaneseq
  %v191 = vshrl.u32 %v190, 7
  %v192 = vsub.s32 2, %v191
  %v193 = vrot.slane %v173, %v192
  %v194 = vlaneseq
  %v195 = vshrl.u32 %v194, 7
  %v196 = vsub.s32 2, %v195
  %v197 = vrot.slane %v177, %v196
  %v198 = vmul.f32 %v156, %v185
  %v199 = vmul.f32 %v156, %v189
  %v200 = vmul.f32 %v160, %v185
  %v201 = vmul.f32 %v160, %v189
  %v202 = vmul.f32 %v156, %v193
  %v203 = vmul.f32 %v156, %v197
  %v204 = vmul.f32 %v160, %v193
  %v205 = vmul.f32 %v160, %v197
  %v206 = vadd.f32 %v146, %v198
  %v207 = vadd.f32 %v147, %v199
  %v208 = vadd.f32 %v148, %v200
  %v209 = vadd.f32 %v149, %v201
  %v210 = vadd.f32 %v150, %v202
  %v211 = vadd.f32 %v151, %v203
  %v212 = vadd.f32 %v152, %v204
  %v213 = vadd.f32 %v153, %v205
  %214 = vset.pattern.permute.xlu0 3
  %215 = vperm.xlu0 %214, %v16
  %v216 = vpop.permute.xlu0 %215
  %218 = vset.pattern.permute.xlu0 3
  %219 = vperm.xlu0 %218, %v17
  %v220 = vpop.permute.xlu0 %219
  %v222 = vlaneseq
  %v223 = vshrl.u32 %v222, 7
  %v224 = vsub.s32 3, %v223
  %v225 = vrot.slane %v14, %v224
  %v226 = vlaneseq
  %v227 = vshrl.u32 %v226, 7
  %v228 = vsub.s32 7, %v227
  %v229 = vrot.slane %v14, %v228
  %v230 = vlaneseq
  %v231 = vshrl.u32 %v230, 7
  %v232 = vsub.s32 3, %v231
  %v233 = vrot.slane %v15, %v232
  %v234 = vlaneseq
  %v235 = vshrl.u32 %v234, 7
  %v236 = vsub.s32 7, %v235
  %v237 = vrot.slane %v15, %v236
  %v242 = vlaneseq
  %v243 = vshrl.u32 %v242, 7
  %v244 = vsub.s32 3, %v243
  %v245 = vrot.slane %v225, %v244
  %v246 = vlaneseq
  %v247 = vshrl.u32 %v246, 7
  %v248 = vsub.s32 3, %v247
  %v249 = vrot.slane %v229, %v248
  %v250 = vlaneseq
  %v251 = vshrl.u32 %v250, 7
  %v252 = vsub.s32 3, %v251
  %v253 = vrot.slane %v233, %v252
  %v254 = vlaneseq
  %v255 = vshrl.u32 %v254, 7
  %v256 = vsub.s32 3, %v255
  %v257 = vrot.slane %v237, %v256
  %v258 = vmul.f32 %v216, %v245
  %v259 = vmul.f32 %v216, %v249
  %v260 = vmul.f32 %v220, %v245
  %v261 = vmul.f32 %v220, %v249
  %v262 = vmul.f32 %v216, %v253
  %v263 = vmul.f32 %v216, %v257
  %v264 = vmul.f32 %v220, %v253
  %v265 = vmul.f32 %v220, %v257
  %v266 = vadd.f32 %v206, %v258
  %v267 = vadd.f32 %v207, %v259
  %v268 = vadd.f32 %v208, %v260
  %v269 = vadd.f32 %v209, %v261
  %v270 = vadd.f32 %v210, %v262
  %v271 = vadd.f32 %v211, %v263
  %v272 = vadd.f32 %v212, %v264
  %v273 = vadd.f32 %v213, %v265
  %v274 = vmul.f32 %v266, %v266
  %v275 = vmul.f32 %v267, %v267
  %v276 = vmul.f32 %v270, %v270
  %v277 = vmul.f32 %v271, %v271
  %v278 = vrot.slane %v274, 4
  %v279 = vadd.f32 %v274, %v278
  %v280 = vrot.slane %v279, 2
  %v281 = vadd.f32 %v279, %v280
  %v282 = vrot.slane %v281, 1
  %v283 = vadd.f32 %v281, %v282
  %v284 = vrot.slane %v275, 4
  %v285 = vadd.f32 %v275, %v284
  %v286 = vrot.slane %v285, 2
  %v287 = vadd.f32 %v285, %v286
  %v288 = vrot.slane %v287, 1
  %v289 = vadd.f32 %v287, %v288
  %v290 = vrot.slane %v276, 4
  %v291 = vadd.f32 %v276, %v290
  %v292 = vrot.slane %v291, 2
  %v293 = vadd.f32 %v291, %v292
  %v294 = vrot.slane %v293, 1
  %v295 = vadd.f32 %v293, %v294
  %v296 = vrot.slane %v277, 4
  %v297 = vadd.f32 %v277, %v296
  %v298 = vrot.slane %v297, 2
  %v299 = vadd.f32 %v297, %v298
  %v300 = vrot.slane %v299, 1
  %v301 = vadd.f32 %v299, %v300
  %v302 = vrsqrt.pop %v283
  %v303 = vrsqrt.pop %v289
  %v304 = vrsqrt.pop %v295
  %v305 = vrsqrt.pop %v301
  %v306 = vmin.f32 %v302, 1e+12
  %v307 = vmin.f32 %v303, 1e+12
  %v308 = vmin.f32 %v304, 1e+12
  %v309 = vmin.f32 %v305, 1e+12
  %v310 = vxor.u32 %v268, 2147483648
  %v311 = vxor.u32 %v269, 2147483648
  %v312 = vxor.u32 %v272, 2147483648
  %v313 = vxor.u32 %v273, 2147483648
  %v314 = vmul.f32 %v310, 1.442695
  %v315 = vpow.pop %v314
  %v316 = vmul.f32 %v311, 1.442695
  %v317 = vpow.pop %v316
  %v318 = vmul.f32 %v312, 1.442695
  %v319 = vpow.pop %v318
  %v320 = vmul.f32 %v313, 1.442695
  %v321 = vpow.pop %v320
  %v322 = vadd.f32 %v315, 1.0
  %v323 = vadd.f32 %v317, 1.0
  %v324 = vadd.f32 %v319, 1.0
  %v325 = vadd.f32 %v321, 1.0
  %v326 = vrcp.pop %v322
  %v327 = vmul.f32 1.0, %v326
  %v328 = vrcp.pop %v323
  %v329 = vmul.f32 1.0, %v328
  %v330 = vrcp.pop %v324
  %v331 = vmul.f32 1.0, %v330
  %v332 = vrcp.pop %v325
  %v333 = vmul.f32 1.0, %v332
  %v334 = vlaneseq
  %v335 = vshrl.u32 %v334, 7
  %v336 = vadd.s32 %v335, 8
  %vm337 = vcmp.lt.s32.totalorder %v335, 8
  %vm338 = vcmp.lt.s32.totalorder %v336, 8
  %v339 = vmul.f32 %v266, %v306
  %v340 = vmul.f32 %v267, %v307
  %v341 = vmul.f32 %v268, %v306
  %v342 = vmul.f32 %v269, %v307
  %v343 = vmul.f32 %v270, %v308
  %v344 = vmul.f32 %v271, %v309
  %v345 = vmul.f32 %v272, %v308
  %v346 = vmul.f32 %v273, %v309
  %vm347 = vcmp.eq.s32.totalorder %v335, 8
  %vm348 = vcmp.eq.s32.totalorder %v336, 8
  %v349 = vlaneseq
  %v350 = vshrl.u32 %v349, 7
  %v351 = vsub.s32 0, %v350
  %v352 = vrot.slane %v327, %v351
  %v353 = vlaneseq
  %v354 = vshrl.u32 %v353, 7
  %v355 = vsub.s32 0, %v354
  %v356 = vrot.slane %v329, %v355
  %v357 = vlaneseq
  %v358 = vshrl.u32 %v357, 7
  %v359 = vsub.s32 0, %v358
  %v360 = vrot.slane %v331, %v359
  %v361 = vlaneseq
  %v362 = vshrl.u32 %v361, 7
  %v363 = vsub.s32 0, %v362
  %v364 = vrot.slane %v333, %v363
  %v365 = vsel %vm347, %v352, %v266
  %v366 = vsel %vm347, %v356, %v267
  %v367 = vsel %vm348, %v352, %v268
  %v368 = vsel %vm348, %v356, %v269
  %v369 = vsel %vm347, %v360, %v270
  %v370 = vsel %vm347, %v364, %v271
  %v371 = vsel %vm348, %v360, %v272
  %v372 = vsel %vm348, %v364, %v273
  %v373 = vsel %vm337, %v339, %v365
  %v374 = vsel %vm337, %v340, %v366
  %v375 = vsel %vm338, %v341, %v367
  %v376 = vsel %vm338, %v342, %v368
  %v377 = vsel %vm337, %v343, %v369
  %v378 = vsel %vm337, %v344, %v370
  %v379 = vsel %vm338, %v345, %v371
  %v380 = vsel %vm338, %v346, %v372
  %381 = vst [vmem:[%s3] sm:$0xff] %v373
  %382 = vst [vmem:[%s3 + $0x8] sm:$0xff] %v374
  %383 = vst [vmem:[%s3 + $0x10] sm:$0xff] %v375
  %384 = vst [vmem:[%s3 + $0x18] sm:$0xff] %v376
  %385 = vst [vmem:[%s3 + $0x20] sm:$0xff] %v377
  %386 = vst [vmem:[%s3 + $0x28] sm:$0xff] %v378
  %387 = vst [vmem:[%s3 + $0x30] sm:$0xff] %v379
  %388 = vst [vmem:[%s3 + $0x38] sm:$0xff] %v380
  // Predicated region
  $region14: #{_instance_head_fused.1} parent=0 // pred_check
    _
  $region15: #{_instance_head_fused.1} parent=0 // pred_check_branch
    %390 = sbr.rel (0) target = $region17
  $region16: #{_instance_head_fused.1} parent=0 // pred_region
    _
  $region17: #{_instance_head_fused.1} parent=0 // pred_fallthru
    _
  // Predicated region
  $region18: #{_instance_head_fused.1} parent=0 // pred_check
    _
  $region19: #{_instance_head_fused.1} parent=0 // pred_check_branch
    %392 = sbr.rel (0) target = $region21
  $region20: #{_instance_head_fused.1} parent=0 // pred_region
    _
  $region21: #{_instance_head_fused.1} parent=0 // pred_fallthru
    _

</llo_original>
